<compile_context>
chip_gen: v7x
topology: tpu7x:2x2x1
jax: 0.10.0
libtpu: 0.0.40
codegen_flags: <defaults>
</compile_context>

<pallas_src>
import functools

import jax
import jax.numpy as jnp
from jax.experimental import pallas as pl
from jax.experimental.pallas import tpu as pltpu


def _round_up(x, m):
    return (x + m - 1) // m * m


def _discriminator_kernel(x_ref,
                          wx_ref, bx_ref,   # fused [fc_in | single_fc]  (F, H+1)
                          w1_ref, b1_ref,   # fc_h1                      (H, H)
                          w2_ref, b2_ref,   # fc_h2                      (H, H)
                          wo_ref, bo_ref,   # fc_out                     (H, 1)
                          o_ref, *, n_hidden, mm_dtype):
    # Fused first layer: one MXU pass of x covers both fc_in (tanh path,
    # columns [0:H)) and single_fc (relu skip path, column H).
    z = jnp.dot(x_ref[...], wx_ref[...],
                preferred_element_type=jnp.float32) + bx_ref[...]
    h = jnp.tanh(z[:, :n_hidden])                            # (tile, H), f32
    skip = jnp.maximum(z[:, n_hidden:n_hidden + 1], 0.0)     # (tile, 1), f32

    # Hidden layers: activations are f32; only the dot operands are cast.
    h = jnp.tanh(jnp.dot(h.astype(mm_dtype), w1_ref[...],
                         preferred_element_type=jnp.float32) + b1_ref[...])
    h = jnp.tanh(jnp.dot(h.astype(mm_dtype), w2_ref[...],
                         preferred_element_type=jnp.float32) + b2_ref[...])

    out = jnp.dot(h.astype(mm_dtype), wo_ref[...],
                  preferred_element_type=jnp.float32) + bo_ref[...]   # (tile, 1)

    o_ref[...] = (out + skip).astype(o_ref.dtype)


def _vmem_bytes(tile, n_feature, n_hidden, op_bytes):
    """Conservative per-kernel VMEM estimate (everything double-buffered)."""
    x_tile = 2 * tile * n_feature * op_bytes
    out_tile = 2 * tile * 1 * 4
    weights = 2 * (n_feature * (n_hidden + 1)
                   + 2 * n_hidden * n_hidden
                   + n_hidden) * op_bytes
    biases = 2 * ((n_hidden + 1) + 2 * n_hidden + 1) * 4
    return x_tile + out_tile + weights + biases


def discriminator_forward(x, params, *, batch_tile=512, use_bf16=False):
    """x: [B, n_feature] float32.  params: dict of weights/biases (see init).

    use_bf16=True is the recommended setting on v6e/v7x: matmul operands
    (x and all weights) are cast once in the wrapper; accumulation and all
    elementwise math remain f32.  use_bf16=False reproduces the PyTorch f32
    forward exactly.
    """
    B, n_feature = x.shape
    n_hidden = params["w_in"].shape[1]
    mm_dtype = jnp.bfloat16 if use_bf16 else jnp.float32
    op_bytes = 2 if use_bf16 else 4
    gran = 16 if use_bf16 else 8   # sublane granularity for the batch tile

    # ---- pack / cast weights once per call in the wrapper (not per grid step)
    w_x = jnp.concatenate([params["w_in"], params["w_s"]], axis=1).astype(mm_dtype)
    b_x = jnp.concatenate([params["b_in"], params["b_s"]], axis=1).astype(jnp.float32)
    w_1 = params["w_h1"].astype(mm_dtype)
    b_1 = params["b_h1"].astype(jnp.float32)
    w_2 = params["w_h2"].astype(mm_dtype)
    b_2 = params["b_h2"].astype(jnp.float32)
    w_o = params["w_out"].astype(mm_dtype)
    b_o = params["b_out"].astype(jnp.float32)
    x = x.astype(mm_dtype)   # halves the dominant input HBM stream when bf16

    # ---- batch tiling: large tiles, B padded up to the tile.
    tile = _round_up(min(batch_tile, _round_up(B, gran)), gran)

    # Keep the per-step VMEM footprint under a budget that fits v7x's 64 MiB
    # physical VMEM with headroom (also fine for v5e/v6e's 128 MiB).
    vmem_budget = 48 * 1024 * 1024
    while tile > gran and _vmem_bytes(tile, n_feature, n_hidden, op_bytes) > vmem_budget:
        tile = max(gran, _round_up(tile // 2, gran))

    b_pad = _round_up(B, tile)
    # Ensure >= 2 grid steps so the "parallel" batch axis can shard across
    # v7x's two TensorCores (costs only ~0.35us on single-TC v5e/v6e).
    while b_pad // tile < 2 and tile > gran:
        tile = max(gran, _round_up(tile // 2, gran))
        b_pad = _round_up(B, tile)

    if b_pad != B:
        x = jnp.pad(x, ((0, b_pad - B), (0, 0)))
    grid = (b_pad // tile,)

    # Raise the scoped-VMEM limit only when the estimate may exceed the
    # smallest default (v5e: 16 MiB); cap below v7x's 64 MiB physical.
    est = _vmem_bytes(tile, n_feature, n_hidden, op_bytes)
    vmem_limit = None
    if est > 12 * 1024 * 1024:
        vmem_limit = int(min(est * 1.5, 56 * 1024 * 1024))

    # Weights/biases: constant block index -> fetched once and kept resident.
    # (For very large F/H, pipeline_mode=pl.Buffered(1) on these specs would
    #  additionally halve the resident weight VMEM.)
    full = lambda shape: pl.BlockSpec(shape, lambda i: (0,) * len(shape))
    in_specs = [
        pl.BlockSpec((tile, n_feature), lambda i: (i, 0)),           # x tile
        full((n_feature, n_hidden + 1)), full((1, n_hidden + 1)),    # fused layer 1
        full((n_hidden, n_hidden)),      full((1, n_hidden)),        # fc_h1
        full((n_hidden, n_hidden)),      full((1, n_hidden)),        # fc_h2
        full((n_hidden, 1)),             full((1, 1)),               # fc_out
    ]
    out_spec = pl.BlockSpec((tile, 1), lambda i: (i, 0))

    kernel = functools.partial(_discriminator_kernel,
                               n_hidden=n_hidden, mm_dtype=mm_dtype)

    out = pl.pallas_call(
        kernel,
        out_shape=jax.ShapeDtypeStruct((b_pad, 1), jnp.float32),
        grid=grid,
        in_specs=in_specs,
        out_specs=out_spec,
        compiler_params=pltpu.CompilerParams(
            dimension_semantics=("parallel",),
            vmem_limit_bytes=vmem_limit),
    )(x, w_x, b_x, w_1, b_1, w_2, b_2, w_o, b_o)

    return out[:B]


def _xavier_uniform(key, fan_in, fan_out):
    # matches torch.nn.init.xavier_uniform_ (gain=1); stored as [in, out]
    limit = jnp.sqrt(6.0 / (fan_in + fan_out))
    return jax.random.uniform(key, (fan_in, fan_out), jnp.float32,
                              minval=-limit, maxval=limit)


def init_discriminator_params(key, n_feature, n_hidden):
    ks = jax.random.split(key, 10)

    # PyTorch nn.Linear default bias init: U(-1/sqrt(fan_in), 1/sqrt(fan_in))
    def bias(k, fan_in, out):
        bound = 1.0 / jnp.sqrt(fan_in)
        return jax.random.uniform(k, (1, out), jnp.float32,
                                  minval=-bound, maxval=bound)

    return {
        "w_in":  _xavier_uniform(ks[0], n_feature, n_hidden),
        "b_in":  bias(ks[1], n_feature, n_hidden),
        "w_h1":  _xavier_uniform(ks[2], n_hidden, n_hidden),
        "b_h1":  bias(ks[3], n_hidden, n_hidden),
        "w_h2":  _xavier_uniform(ks[4], n_hidden, n_hidden),
        "b_h2":  bias(ks[5], n_hidden, n_hidden),
        "w_out": _xavier_uniform(ks[6], n_hidden, 1),
        "b_out": bias(ks[7], n_hidden, 1),
        "w_s":   _xavier_uniform(ks[8], n_feature, 1),
        "b_s":   bias(ks[9], n_feature, 1),
    }


def _reference_forward(x, p):
    h = jnp.tanh(x @ p["w_in"] + p["b_in"])
    h = jnp.tanh(h @ p["w_h1"] + p["b_h1"])
    h = jnp.tanh(h @ p["w_h2"] + p["b_h2"])
    out = h @ p["w_out"] + p["b_out"]
    skip = jnp.maximum(x @ p["w_s"] + p["b_s"], 0.0)
    return out + skip


if __name__ == "__main__":
    key = jax.random.PRNGKey(0)
    k_x, k_p = jax.random.split(key)

    B, n_feature, n_hidden = 8, 32, 32
    x = jax.random.normal(k_x, (B, n_feature), jnp.float32)
    params = init_discriminator_params(k_p, n_feature, n_hidden)

    ref = _reference_forward(x, params)

    # exact-precision path (f32 matmul operands)
    out = jax.block_until_ready(discriminator_forward(x, params))
    assert out.shape == (B, 1)
    assert jnp.allclose(out, ref, atol=1e-5, rtol=1e-5)

    # ragged batch: exercises tail padding + the grid>=2 (dual-TC) path
    x2 = jax.random.normal(k_x, (13, n_feature), jnp.float32)
    out2 = jax.block_until_ready(discriminator_forward(x2, params))
    assert out2.shape == (13, 1)
    assert jnp.allclose(out2, _reference_forward(x2, params), atol=1e-5, rtol=1e-5)

    # bf16 matmul-operand path (recommended on v6e/v7x); looser tolerance is
    # expected precision loss, not a bug.
    out_bf16 = jax.block_until_ready(
        discriminator_forward(x, params, use_bf16=True))
    assert out_bf16.shape == (B, 1)
    assert jnp.allclose(out_bf16, ref, atol=1e-1, rtol=1e-1)

    print("KERNEL_OK")
</pallas_src>

<mosaic_0001>
module attributes {stable_mosaic.version = 11 : i64} {
  func.func @_discriminator_kernel(%arg0: i32, %arg1: memref<8x32xf32, #tpu.memory_space<vmem>>, %arg2: memref<32x33xf32, #tpu.memory_space<vmem>>, %arg3: memref<1x33xf32, #tpu.memory_space<vmem>>, %arg4: memref<32x32xf32, #tpu.memory_space<vmem>>, %arg5: memref<1x32xf32, #tpu.memory_space<vmem>>, %arg6: memref<32x32xf32, #tpu.memory_space<vmem>>, %arg7: memref<1x32xf32, #tpu.memory_space<vmem>>, %arg8: memref<32x1xf32, #tpu.memory_space<vmem>>, %arg9: memref<1x1xf32, #tpu.memory_space<vmem>>, %arg10: memref<8x1xf32, #tpu.memory_space<vmem>>) attributes {dimension_semantics = [#tpu.dimension_semantics<parallel>], iteration_bounds = array<i64: 1>, scalar_prefetch = 0 : i64, scratch_operands = 0 : i64, tpu.core_type = #tpu.core_type<tc>, window_params = [{transform_indices = @transform_0, window_bounds = array<i64: 8, 32>}, {pipeline_mode = #tpu.pipeline_mode<synchronous>, transform_indices = @transform_1, window_bounds = array<i64: 32, 33>}, {pipeline_mode = #tpu.pipeline_mode<synchronous>, transform_indices = @transform_2, window_bounds = array<i64: 1, 33>}, {pipeline_mode = #tpu.pipeline_mode<synchronous>, transform_indices = @transform_3, window_bounds = array<i64: 32, 32>}, {pipeline_mode = #tpu.pipeline_mode<synchronous>, transform_indices = @transform_4, window_bounds = array<i64: 1, 32>}, {pipeline_mode = #tpu.pipeline_mode<synchronous>, transform_indices = @transform_5, window_bounds = array<i64: 32, 32>}, {pipeline_mode = #tpu.pipeline_mode<synchronous>, transform_indices = @transform_6, window_bounds = array<i64: 1, 32>}, {pipeline_mode = #tpu.pipeline_mode<synchronous>, transform_indices = @transform_7, window_bounds = array<i64: 32, 1>}, {pipeline_mode = #tpu.pipeline_mode<synchronous>, transform_indices = @transform_8, window_bounds = array<i64: 1, 1>}, {transform_indices = @transform_9, window_bounds = array<i64: 8, 1>}]} {
    %c0 = arith.constant 0 : index
    %c0_0 = arith.constant 0 : index
    %0 = vector.load %arg1[%c0, %c0_0] : memref<8x32xf32, #tpu.memory_space<vmem>>, vector<8x32xf32>
    %c0_1 = arith.constant 0 : index
    %c0_2 = arith.constant 0 : index
    %1 = vector.load %arg2[%c0_1, %c0_2] : memref<32x33xf32, #tpu.memory_space<vmem>>, vector<32x33xf32>
    %cst = arith.constant dense<0.000000e+00> : vector<8x33xf32>
    %2 = tpu.matmul %0, %1, %cst {dimension_numbers = #tpu.dot_dimension_numbers<[1], [0], [0], [1], [0, 0, 1, 1], [], []>} : vector<8x32xf32>, vector<32x33xf32>, vector<8x33xf32> -> vector<8x33xf32>
    %c0_3 = arith.constant 0 : index
    %c0_4 = arith.constant 0 : index
    %3 = vector.load %arg3[%c0_3, %c0_4] : memref<1x33xf32, #tpu.memory_space<vmem>>, vector<1x33xf32>
    %4 = vector.broadcast %3 : vector<1x33xf32> to vector<8x33xf32>
    %5 = arith.addf %2, %4 : vector<8x33xf32>
    %6 = vector.extract_strided_slice %5 {offsets = [0, 0], sizes = [8, 32], strides = [1, 1]} : vector<8x33xf32> to vector<8x32xf32>
    %7 = math.tanh %6 : vector<8x32xf32>
    %8 = vector.extract_strided_slice %5 {offsets = [0, 32], sizes = [8, 1], strides = [1, 1]} : vector<8x33xf32> to vector<8x1xf32>
    %cst_5 = arith.constant 0.000000e+00 : f32
    %9 = vector.broadcast %cst_5 : f32 to vector<8x1xf32>
    %10 = arith.maximumf %8, %9 : vector<8x1xf32>
    %c0_6 = arith.constant 0 : index
    %c0_7 = arith.constant 0 : index
    %11 = vector.load %arg4[%c0_6, %c0_7] : memref<32x32xf32, #tpu.memory_space<vmem>>, vector<32x32xf32>
    %cst_8 = arith.constant dense<0.000000e+00> : vector<8x32xf32>
    %12 = tpu.matmul %7, %11, %cst_8 {dimension_numbers = #tpu.dot_dimension_numbers<[1], [0], [0], [1], [0, 0, 1, 1], [], []>} : vector<8x32xf32>, vector<32x32xf32>, vector<8x32xf32> -> vector<8x32xf32>
    %c0_9 = arith.constant 0 : index
    %c0_10 = arith.constant 0 : index
    %13 = vector.load %arg5[%c0_9, %c0_10] : memref<1x32xf32, #tpu.memory_space<vmem>>, vector<1x32xf32>
    %14 = vector.broadcast %13 : vector<1x32xf32> to vector<8x32xf32>
    %15 = arith.addf %12, %14 : vector<8x32xf32>
    %16 = math.tanh %15 : vector<8x32xf32>
    %c0_11 = arith.constant 0 : index
    %c0_12 = arith.constant 0 : index
    %17 = vector.load %arg6[%c0_11, %c0_12] : memref<32x32xf32, #tpu.memory_space<vmem>>, vector<32x32xf32>
    %cst_13 = arith.constant dense<0.000000e+00> : vector<8x32xf32>
    %18 = tpu.matmul %16, %17, %cst_13 {dimension_numbers = #tpu.dot_dimension_numbers<[1], [0], [0], [1], [0, 0, 1, 1], [], []>} : vector<8x32xf32>, vector<32x32xf32>, vector<8x32xf32> -> vector<8x32xf32>
    %c0_14 = arith.constant 0 : index
    %c0_15 = arith.constant 0 : index
    %19 = vector.load %arg7[%c0_14, %c0_15] : memref<1x32xf32, #tpu.memory_space<vmem>>, vector<1x32xf32>
    %20 = vector.broadcast %19 : vector<1x32xf32> to vector<8x32xf32>
    %21 = arith.addf %18, %20 : vector<8x32xf32>
    %22 = math.tanh %21 : vector<8x32xf32>
    %c0_16 = arith.constant 0 : index
    %c0_17 = arith.constant 0 : index
    %23 = vector.load %arg8[%c0_16, %c0_17] : memref<32x1xf32, #tpu.memory_space<vmem>>, vector<32x1xf32>
    %cst_18 = arith.constant dense<0.000000e+00> : vector<8x1xf32>
    %24 = tpu.matmul %22, %23, %cst_18 {dimension_numbers = #tpu.dot_dimension_numbers<[1], [0], [0], [1], [0, 0, 1, 1], [], []>} : vector<8x32xf32>, vector<32x1xf32>, vector<8x1xf32> -> vector<8x1xf32>
    %c0_19 = arith.constant 0 : index
    %c0_20 = arith.constant 0 : index
    %25 = vector.load %arg9[%c0_19, %c0_20] : memref<1x1xf32, #tpu.memory_space<vmem>>, vector<1x1xf32>
    %26 = vector.broadcast %25 : vector<1x1xf32> to vector<8x1xf32>
    %27 = arith.addf %24, %26 : vector<8x1xf32>
    %28 = arith.addf %27, %10 : vector<8x1xf32>
    %c0_21 = arith.constant 0 : index
    %c0_22 = arith.constant 0 : index
    %29 = vector.load %arg10[%c0_21, %c0_22] : memref<8x1xf32, #tpu.memory_space<vmem>>, vector<8x1xf32>
    tpu.vector_store %arg10[%c0_21, %c0_22], %28 {strides = array<i32>} : memref<8x1xf32, #tpu.memory_space<vmem>>, vector<8x1xf32>,
    return
  }
  func.func @transform_0(%arg0: i32) -> (i32, i32) {
    %c0_i32 = arith.constant 0 : i32
    %c0_i32_0 = arith.constant 0 : i32
    return %arg0, %c0_i32 : i32, i32
  }
  func.func @transform_1(%arg0: i32) -> (i32, i32) {
    %c0_i32 = arith.constant 0 : i32
    %c0_i32_0 = arith.constant 0 : i32
    %c0_i32_1 = arith.constant 0 : i32
    return %c0_i32, %c0_i32_0 : i32, i32
  }
  func.func @transform_2(%arg0: i32) -> (i32, i32) {
    %c0_i32 = arith.constant 0 : i32
    %c0_i32_0 = arith.constant 0 : i32
    %c0_i32_1 = arith.constant 0 : i32
    return %c0_i32, %c0_i32_0 : i32, i32
  }
  func.func @transform_3(%arg0: i32) -> (i32, i32) {
    %c0_i32 = arith.constant 0 : i32
    %c0_i32_0 = arith.constant 0 : i32
    %c0_i32_1 = arith.constant 0 : i32
    return %c0_i32, %c0_i32_0 : i32, i32
  }
  func.func @transform_4(%arg0: i32) -> (i32, i32) {
    %c0_i32 = arith.constant 0 : i32
    %c0_i32_0 = arith.constant 0 : i32
    %c0_i32_1 = arith.constant 0 : i32
    return %c0_i32, %c0_i32_0 : i32, i32
  }
  func.func @transform_5(%arg0: i32) -> (i32, i32) {
    %c0_i32 = arith.constant 0 : i32
    %c0_i32_0 = arith.constant 0 : i32
    %c0_i32_1 = arith.constant 0 : i32
    return %c0_i32, %c0_i32_0 : i32, i32
  }
  func.func @transform_6(%arg0: i32) -> (i32, i32) {
    %c0_i32 = arith.constant 0 : i32
    %c0_i32_0 = arith.constant 0 : i32
    %c0_i32_1 = arith.constant 0 : i32
    return %c0_i32, %c0_i32_0 : i32, i32
  }
  func.func @transform_7(%arg0: i32) -> (i32, i32) {
    %c0_i32 = arith.constant 0 : i32
    %c0_i32_0 = arith.constant 0 : i32
    %c0_i32_1 = arith.constant 0 : i32
    return %c0_i32, %c0_i32_0 : i32, i32
  }
  func.func @transform_8(%arg0: i32) -> (i32, i32) {
    %c0_i32 = arith.constant 0 : i32
    %c0_i32_0 = arith.constant 0 : i32
    %c0_i32_1 = arith.constant 0 : i32
    return %c0_i32, %c0_i32_0 : i32, i32
  }
  func.func @transform_9(%arg0: i32) -> (i32, i32) {
    %c0_i32 = arith.constant 0 : i32
    %c0_i32_0 = arith.constant 0 : i32
    return %arg0, %c0_i32 : i32, i32
  }
}

</mosaic_0001>

<llo_original>
// kernel: tpu_custom_call.1
$region0: #{tpu_custom_call.1}
  #allocation0 [shape = 'u32[]', space=smem, size = 0x4, offset = 0x4, fixed_abs, tag = 'smem constant byte address 0x4 - core index']
  #allocation1 [shape = 'u32[144,128]{1,0:T(1,128)}', space=vmem, size = 0x12000, scoped, tag = 'internal scratch']
  #allocation2 [shape = 'f32[1,1]{1,0:T(1,128)S(1)}', space=vmem, size = 0x200, scoped, tag = 'scoped memory for tpu_custom_call.1']
  %s0 = inlined_call_operand.vmem [shape: f32[8,32], index: 0, kind: input, shape index: {}]
  %s1 = inlined_call_operand.vmem [shape: f32[32,33], index: 1, kind: input, shape index: {}]
  %s2 = inlined_call_operand.vmem [shape: f32[1,33], index: 2, kind: input, shape index: {}]
  %s3 = inlined_call_operand.hbm [shape: f32[32,32], index: 3, kind: input, shape index: {}]
  %s4 = inlined_call_operand.vmem [shape: f32[1,32], index: 4, kind: input, shape index: {}]
  %s5 = inlined_call_operand.hbm [shape: f32[32,32], index: 5, kind: input, shape index: {}]
  %s6 = inlined_call_operand.vmem [shape: f32[1,32], index: 6, kind: input, shape index: {}]
  %s7 = inlined_call_operand.vmem [shape: f32[32,1], index: 7, kind: input, shape index: {}]
  %s8 = inlined_call_operand.<no memory space> [shape: f32[1,1], index: 8, kind: input, shape index: {}]
  %s9 = inlined_call_operand.vmem [shape: f32[8,1], index: 9, kind: output, shape index: {}]
  %s10 = sld [smem:[#allocation0]]
  $region54: #{tpu_custom_call.1} parent=0
    _
  %s12 = ssub.s32 1, %s10
  %s13 = scalar_select 0, %s12, %s10
  %v14 = vstv %s8
  %15 = vst [vmem:[#allocation2] sm:$0x1] %v14
  $region1: #{tpu_custom_call.1} parent=0
    #allocation3 [shape = 'u8[16384]{0}', space=vmem, size = 0x4000, scoped, tag = 'input window, operand 3, single buffered']
    #allocation4 [shape = 's32[1]{0}', space=sflag, size = 0x4, scoped, tag = 'scoped memory for tpu_custom_call.1']
    #allocation5 [shape = 'u8[16384]{0}', space=vmem, size = 0x4000, scoped, tag = 'input window, operand 5, single buffered']
    #allocation6 [shape = 's32[1]{0}', space=sflag, size = 0x4, scoped, tag = 'scoped memory for tpu_custom_call.1']
    %16 = vsyncpa [#allocation4], 0
    %17 = vsyncpa [#allocation6], 0
    // Predicated region
    $region2: #{tpu_custom_call.1} parent=1 // pred_check
      _
    $region3: #{tpu_custom_call.1} parent=1 // pred_check_branch
      %19 = sbr.rel (0) target = $region5
    $region4: #{tpu_custom_call.1} parent=1 // pred_region
      _
    $region5: #{tpu_custom_call.1} parent=1 // pred_fallthru
      _
    // Predicated region
    $region6: #{tpu_custom_call.1} parent=1 // pred_check
      _
    $region7: #{tpu_custom_call.1} parent=1 // pred_check_branch
      %21 = sbr.rel (0) target = $region9
    $region8: #{tpu_custom_call.1} parent=1 // pred_region
      _
    $region9: #{tpu_custom_call.1} parent=1 // pred_fallthru
      _
    // Predicated region
    $region10: #{tpu_custom_call.1} parent=1 // pred_check
      _
    $region11: #{tpu_custom_call.1} parent=1 // pred_check_branch
      %23 = sbr.rel (0) target = $region13
    $region12: #{tpu_custom_call.1} parent=1 // pred_region
      _
    $region13: #{tpu_custom_call.1} parent=1 // pred_fallthru
      _
    // Predicated region
    $region14: #{tpu_custom_call.1} parent=1 // pred_check
      _
    $region15: #{tpu_custom_call.1} parent=1 // pred_check_branch
      %25 = sbr.rel (0) target = $region17
    $region16: #{tpu_custom_call.1} parent=1 // pred_region
      %s27 = ssub.s32 512, 512
      %28 = vsyncadd [#allocation4], %s27
      %s29 = sshll.u32 [#allocation3], 4
      %s30 = int_to_ptr.vmem [resolvable:$true] %s29
      %35 = dma.hbm_to_vmem [thread:$0]  %s3, 512, %s30, [#allocation4], 128, 128, 8
    $region17: #{tpu_custom_call.1} parent=1 // pred_fallthru
      _
    // Predicated region
    $region18: #{tpu_custom_call.1} parent=1 // pred_check
      _
    $region19: #{tpu_custom_call.1} parent=1 // pred_check_branch
      %37 = sbr.rel (0) target = $region21
    $region20: #{tpu_custom_call.1} parent=1 // pred_region
      _
    $region21: #{tpu_custom_call.1} parent=1 // pred_fallthru
      _
    // Predicated region
    $region22: #{tpu_custom_call.1} parent=1 // pred_check
      _
    $region23: #{tpu_custom_call.1} parent=1 // pred_check_branch
      %39 = sbr.rel (0) target = $region25
    $region24: #{tpu_custom_call.1} parent=1 // pred_region
      %s41 = ssub.s32 512, 512
      %42 = vsyncadd [#allocation6], %s41
      %s43 = sshll.u32 [#allocation5], 4
      %s44 = int_to_ptr.vmem [resolvable:$true] %s43
      %49 = dma.hbm_to_vmem [thread:$0]  %s5, 512, %s44, [#allocation6], 128, 128, 8
    $region25: #{tpu_custom_call.1} parent=1 // pred_fallthru
      _
    // Predicated region
    $region26: #{tpu_custom_call.1} parent=1 // pred_check
      _
    $region27: #{tpu_custom_call.1} parent=1 // pred_check_branch
      %51 = sbr.rel (0) target = $region29
    $region28: #{tpu_custom_call.1} parent=1 // pred_region
      _
    $region29: #{tpu_custom_call.1} parent=1 // pred_fallthru
      _
    // Predicated region
    $region30: #{tpu_custom_call.1} parent=1 // pred_check
      _
    $region31: #{tpu_custom_call.1} parent=1 // pred_check_branch
      %53 = sbr.rel (0) target = $region33
    $region32: #{tpu_custom_call.1} parent=1 // pred_region
      _
    $region33: #{tpu_custom_call.1} parent=1 // pred_fallthru
      _
    // Predicated region
    $region34: #{tpu_custom_call.1} parent=1 // pred_check
      _
    $region35: #{tpu_custom_call.1} parent=1 // pred_check_branch
      %55 = sbr.rel (0) target = $region37
    $region36: #{tpu_custom_call.1} parent=1 // pred_region
      _
    $region37: #{tpu_custom_call.1} parent=1 // pred_fallthru
      _
    // Predicated region
    $region38: #{tpu_custom_call.1} parent=1 // pred_check
      _
    $region39: #{tpu_custom_call.1} parent=1 // pred_check_branch
      %57 = sbr.rel (0) target = $region41
    $region40: #{tpu_custom_call.1} parent=1 // pred_region
      %58 = dma.done [#allocation4], 512
    $region41: #{tpu_custom_call.1} parent=1 // pred_fallthru
      _
    // Predicated region
    $region42: #{tpu_custom_call.1} parent=1 // pred_check
      _
    $region43: #{tpu_custom_call.1} parent=1 // pred_check_branch
      %60 = sbr.rel (0) target = $region45
    $region44: #{tpu_custom_call.1} parent=1 // pred_region
      %61 = dma.done [#allocation6], 512
    $region45: #{tpu_custom_call.1} parent=1 // pred_fallthru
      _
    %v62 = vld [vmem:[%s0] sm:$0xff]
    %v63 = vld [vmem:[%s1] sm:$0xff]
    %v64 = vld [vmem:[%s1 + $0x8] sm:$0xff]
    %v65 = vld [vmem:[%s1 + $0x10] sm:$0xff]
    %v66 = vld [vmem:[%s1 + $0x18] sm:$0xff]
    %v67 = vld [vmem:[%s2] sm:$0x1]
    %v69 = vlaneseq
    %v70 = vshrl.u32 %v69, 7
    %v71 = vsub.s32 0, %v70
    %v72 = vrot.slane %v67, %v71
    %vm74 = vcmask 261120
    %v76 = vsel %vm74, %v62, 0
    %78 = vmatprep.subr.mxu0 0.0
    %79 = vmatpush1.msra.mxu0 %v63
    %80 = vmatprep.subr.mxu0 0.0
    %81 = vmatpush1.msra.mxu0 %v64
    %82 = vmatprep.subr.mxu0 0.0
    %83 = vmatpush1.msra.mxu0 %v65
    %84 = vmatprep.subr.mxu0 0.0
    %85 = vmatpush1.msra.mxu0 %v66
    %86 = vmatprep.subr.mxu0 0.0
    %87 = vmatpush1.msra.mxu0 0.0
    %88 = vmatprep.subr.mxu0 0.0
    %89 = vmatpush1.msra.mxu0 0.0
    %90 = vmatprep.subr.mxu0 0.0
    %91 = vmatpush1.msra.mxu0 0.0
    %92 = vmatprep.subr.mxu0 0.0
    %93 = vmatpush1.msra.mxu0 0.0
    %94 = vmatprep.subr.mxu0 0.0
    %95 = vmatpush1.msra.mxu0 0.0
    %96 = vmatprep.subr.mxu0 0.0
    %97 = vmatpush1.msra.mxu0 0.0
    %98 = vmatprep.subr.mxu0 0.0
    %99 = vmatpush1.msra.mxu0 0.0
    %100 = vmatprep.subr.mxu0 0.0
    %101 = vmatpush1.msra.mxu0 0.0
    %102 = vmatprep.subr.mxu0 0.0
    %103 = vmatpush1.msra.mxu0 0.0
    %104 = vmatprep.subr.mxu0 0.0
    %105 = vmatpush1.msra.mxu0 0.0
    %106 = vmatprep.subr.mxu0 0.0
    %107 = vmatpush1.msra.mxu0 0.0
    %108 = vmatprep.subr.mxu0 0.0
    %109 = vmatpush1.msra.mxu0 0.0
    %110 = vmatprep.subr.mxu0 0.0
    %111 = vmatpush1.msra.mxu0 0.0
    %112 = vmatprep.subr.mxu0 0.0
    %113 = vmatpush1.msra.mxu0 0.0
    %114 = vmatprep.subr.mxu0 0.0
    %115 = vmatpush1.msra.mxu0 0.0
    %116 = vmatprep.subr.mxu0 0.0
    %117 = vmatpush1.msra.mxu0 0.0
    %118 = vmatprep.subr.mxu0 0.0
    %119 = vmatpush1.msra.mxu0 0.0
    %120 = vmatprep.subr.mxu0 0.0
    %121 = vmatpush1.msra.mxu0 0.0
    %122 = vmatprep.subr.mxu0 0.0
    %123 = vmatpush1.msra.mxu0 0.0
    %124 = vmatprep.subr.mxu0 0.0
    %125 = vmatpush1.msra.mxu0 0.0
    %126 = vmatprep.subr.mxu0 0.0
    %127 = vmatpush1.msra.mxu0 0.0
    %128 = vmatprep.subr.mxu0 0.0
    %129 = vmatpush1.msra.mxu0 0.0
    %130 = vmatprep.subr.mxu0 0.0
    %131 = vmatpush1.msra.mxu0 0.0
    %132 = vmatprep.subr.mxu0 0.0
    %133 = vmatpush1.msra.mxu0 0.0
    %134 = vmatprep.subr.mxu0 0.0
    %135 = vmatpush1.msra.mxu0 0.0
    %136 = vmatprep.subr.mxu0 0.0
    %137 = vmatpush1.msra.mxu0 0.0
    %138 = vmatprep.subr.mxu0 0.0
    %139 = vmatpush1.msra.mxu0 0.0
    %140 = vmatprep.subr.mxu0 0.0
    %141 = vmatpush1.msra.mxu0 0.0
    %142 = vmatprep.mubr.f32.mxu0 0.0
    %143 = vmatmul.mubr.f32.gmra.mrb[0].mxu0 %v76
    %v144 = vpop.f32.mrb[0].mxu0
    %v145 = vadd.f32 %v72, %v144
    %v146 = vpop.f32.mrb[0].mxu0
    %147 = vdwg.mxu0
    %v148 = vtanh.pop %v145
    %v149 = vmax.f32 %v145, 0.0
    %v150 = vld [vmem:[#allocation3] sm:$0xff]
    %v151 = vld [vmem:[#allocation3 + $0x8] sm:$0xff]
    %v152 = vld [vmem:[#allocation3 + $0x10] sm:$0xff]
    %v153 = vld [vmem:[#allocation3 + $0x18] sm:$0xff]
    %v154 = vld [vmem:[%s4] sm:$0x1]
    %v156 = vlaneseq
    %v157 = vshrl.u32 %v156, 7
    %v158 = vsub.s32 0, %v157
    %v159 = vrot.slane %v154, %v158
    %v162 = vsel %vm74, %v148, 0
    %164 = vmatprep.subr.mxu0 0.0
    %165 = vmatpush1.msra.mxu0 %v150
    %166 = vmatprep.subr.mxu0 0.0
    %167 = vmatpush1.msra.mxu0 %v151
    %168 = vmatprep.subr.mxu0 0.0
    %169 = vmatpush1.msra.mxu0 %v152
    %170 = vmatprep.subr.mxu0 0.0
    %171 = vmatpush1.msra.mxu0 %v153
    %172 = vmatprep.subr.mxu0 0.0
    %173 = vmatpush1.msra.mxu0 0.0
    %174 = vmatprep.subr.mxu0 0.0
    %175 = vmatpush1.msra.mxu0 0.0
    %176 = vmatprep.subr.mxu0 0.0
    %177 = vmatpush1.msra.mxu0 0.0
    %178 = vmatprep.subr.mxu0 0.0
    %179 = vmatpush1.msra.mxu0 0.0
    %180 = vmatprep.subr.mxu0 0.0
    %181 = vmatpush1.msra.mxu0 0.0
    %182 = vmatprep.subr.mxu0 0.0
    %183 = vmatpush1.msra.mxu0 0.0
    %184 = vmatprep.subr.mxu0 0.0
    %185 = vmatpush1.msra.mxu0 0.0
    %186 = vmatprep.subr.mxu0 0.0
    %187 = vmatpush1.msra.mxu0 0.0
    %188 = vmatprep.subr.mxu0 0.0
    %189 = vmatpush1.msra.mxu0 0.0
    %190 = vmatprep.subr.mxu0 0.0
    %191 = vmatpush1.msra.mxu0 0.0
    %192 = vmatprep.subr.mxu0 0.0
    %193 = vmatpush1.msra.mxu0 0.0
    %194 = vmatprep.subr.mxu0 0.0
    %195 = vmatpush1.msra.mxu0 0.0
    %196 = vmatprep.subr.mxu0 0.0
    %197 = vmatpush1.msra.mxu0 0.0
    %198 = vmatprep.subr.mxu0 0.0
    %199 = vmatpush1.msra.mxu0 0.0
    %200 = vmatprep.subr.mxu0 0.0
    %201 = vmatpush1.msra.mxu0 0.0
    %202 = vmatprep.subr.mxu0 0.0
    %203 = vmatpush1.msra.mxu0 0.0
    %204 = vmatprep.subr.mxu0 0.0
    %205 = vmatpush1.msra.mxu0 0.0
    %206 = vmatprep.subr.mxu0 0.0
    %207 = vmatpush1.msra.mxu0 0.0
    %208 = vmatprep.subr.mxu0 0.0
    %209 = vmatpush1.msra.mxu0 0.0
    %210 = vmatprep.subr.mxu0 0.0
    %211 = vmatpush1.msra.mxu0 0.0
    %212 = vmatprep.subr.mxu0 0.0
    %213 = vmatpush1.msra.mxu0 0.0
    %214 = vmatprep.subr.mxu0 0.0
    %215 = vmatpush1.msra.mxu0 0.0
    %216 = vmatprep.subr.mxu0 0.0
    %217 = vmatpush1.msra.mxu0 0.0
    %218 = vmatprep.subr.mxu0 0.0
    %219 = vmatpush1.msra.mxu0 0.0
    %220 = vmatprep.subr.mxu0 0.0
    %221 = vmatpush1.msra.mxu0 0.0
    %222 = vmatprep.subr.mxu0 0.0
    %223 = vmatpush1.msra.mxu0 0.0
    %224 = vmatprep.subr.mxu0 0.0
    %225 = vmatpush1.msra.mxu0 0.0
    %226 = vmatprep.subr.mxu0 0.0
    %227 = vmatpush1.msra.mxu0 0.0
    %228 = vmatprep.mubr.f32.mxu0 0.0
    %229 = vmatmul.mubr.f32.gmra.mrb[0].mxu0 %v162
    %v230 = vpop.f32.mrb[0].mxu0
    %v231 = vadd.f32 %v159, %v230
    %v232 = vpop.f32.mrb[0].mxu0
    %233 = vdwg.mxu0
    %v234 = vtanh.pop %v231
    %v235 = vld [vmem:[#allocation5] sm:$0xff]
    %v236 = vld [vmem:[#allocation5 + $0x8] sm:$0xff]
    %v237 = vld [vmem:[#allocation5 + $0x10] sm:$0xff]
    %v238 = vld [vmem:[#allocation5 + $0x18] sm:$0xff]
    %v239 = vld [vmem:[%s6] sm:$0x1]
    %v241 = vlaneseq
    %v242 = vshrl.u32 %v241, 7
    %v243 = vsub.s32 0, %v242
    %v244 = vrot.slane %v239, %v243
    %v247 = vsel %vm74, %v234, 0
    %249 = vmatprep.subr.mxu0 0.0
    %250 = vmatpush1.msra.mxu0 %v235
    %251 = vmatprep.subr.mxu0 0.0
    %252 = vmatpush1.msra.mxu0 %v236
    %253 = vmatprep.subr.mxu0 0.0
    %254 = vmatpush1.msra.mxu0 %v237
    %255 = vmatprep.subr.mxu0 0.0
    %256 = vmatpush1.msra.mxu0 %v238
    %257 = vmatprep.subr.mxu0 0.0
    %258 = vmatpush1.msra.mxu0 0.0
    %259 = vmatprep.subr.mxu0 0.0
    %260 = vmatpush1.msra.mxu0 0.0
    %261 = vmatprep.subr.mxu0 0.0
    %262 = vmatpush1.msra.mxu0 0.0
    %263 = vmatprep.subr.mxu0 0.0
    %264 = vmatpush1.msra.mxu0 0.0
    %265 = vmatprep.subr.mxu0 0.0
    %266 = vmatpush1.msra.mxu0 0.0
    %267 = vmatprep.subr.mxu0 0.0
    %268 = vmatpush1.msra.mxu0 0.0
    %269 = vmatprep.subr.mxu0 0.0
    %270 = vmatpush1.msra.mxu0 0.0
    %271 = vmatprep.subr.mxu0 0.0
    %272 = vmatpush1.msra.mxu0 0.0
    %273 = vmatprep.subr.mxu0 0.0
    %274 = vmatpush1.msra.mxu0 0.0
    %275 = vmatprep.subr.mxu0 0.0
    %276 = vmatpush1.msra.mxu0 0.0
    %277 = vmatprep.subr.mxu0 0.0
    %278 = vmatpush1.msra.mxu0 0.0
    %279 = vmatprep.subr.mxu0 0.0
    %280 = vmatpush1.msra.mxu0 0.0
    %281 = vmatprep.subr.mxu0 0.0
    %282 = vmatpush1.msra.mxu0 0.0
    %283 = vmatprep.subr.mxu0 0.0
    %284 = vmatpush1.msra.mxu0 0.0
    %285 = vmatprep.subr.mxu0 0.0
    %286 = vmatpush1.msra.mxu0 0.0
    %287 = vmatprep.subr.mxu0 0.0
    %288 = vmatpush1.msra.mxu0 0.0
    %289 = vmatprep.subr.mxu0 0.0
    %290 = vmatpush1.msra.mxu0 0.0
    %291 = vmatprep.subr.mxu0 0.0
    %292 = vmatpush1.msra.mxu0 0.0
    %293 = vmatprep.subr.mxu0 0.0
    %294 = vmatpush1.msra.mxu0 0.0
    %295 = vmatprep.subr.mxu0 0.0
    %296 = vmatpush1.msra.mxu0 0.0
    %297 = vmatprep.subr.mxu0 0.0
    %298 = vmatpush1.msra.mxu0 0.0
    %299 = vmatprep.subr.mxu0 0.0
    %300 = vmatpush1.msra.mxu0 0.0
    %301 = vmatprep.subr.mxu0 0.0
    %302 = vmatpush1.msra.mxu0 0.0
    %303 = vmatprep.subr.mxu0 0.0
    %304 = vmatpush1.msra.mxu0 0.0
    %305 = vmatprep.subr.mxu0 0.0
    %306 = vmatpush1.msra.mxu0 0.0
    %307 = vmatprep.subr.mxu0 0.0
    %308 = vmatpush1.msra.mxu0 0.0
    %309 = vmatprep.subr.mxu0 0.0
    %310 = vmatpush1.msra.mxu0 0.0
    %311 = vmatprep.subr.mxu0 0.0
    %312 = vmatpush1.msra.mxu0 0.0
    %313 = vmatprep.mubr.f32.mxu0 0.0
    %314 = vmatmul.mubr.f32.gmra.mrb[0].mxu0 %v247
    %v315 = vpop.f32.mrb[0].mxu0
    %v316 = vadd.f32 %v244, %v315
    %v317 = vpop.f32.mrb[0].mxu0
    %318 = vdwg.mxu0
    %v319 = vtanh.pop %v316
    %v320 = vld [vmem:[%s7] sm:$0xff]
    %v321 = vld [vmem:[%s7 + $0x8] sm:$0xff]
    %v322 = vld [vmem:[%s7 + $0x10] sm:$0xff]
    %v323 = vld [vmem:[%s7 + $0x18] sm:$0xff]
    %v324 = vld [vmem:[#allocation2] sm:$0x1]
    %v326 = vlaneseq
    %v327 = vshrl.u32 %v326, 7
    %v328 = vsub.s32 0, %v327
    %v329 = vrot.slane %v324, %v328
    %v332 = vsel %vm74, %v319, 0
    %334 = vmatprep.subr.mxu0 0.0
    %335 = vmatpush1.msra.mxu0 %v320
    %336 = vmatprep.subr.mxu0 0.0
    %337 = vmatpush1.msra.mxu0 %v321
    %338 = vmatprep.subr.mxu0 0.0
    %339 = vmatpush1.msra.mxu0 %v322
    %340 = vmatprep.subr.mxu0 0.0
    %341 = vmatpush1.msra.mxu0 %v323
    %342 = vmatprep.subr.mxu0 0.0
    %343 = vmatpush1.msra.mxu0 0.0
    %344 = vmatprep.subr.mxu0 0.0
    %345 = vmatpush1.msra.mxu0 0.0
    %346 = vmatprep.subr.mxu0 0.0
    %347 = vmatpush1.msra.mxu0 0.0
    %348 = vmatprep.subr.mxu0 0.0
    %349 = vmatpush1.msra.mxu0 0.0
    %350 = vmatprep.subr.mxu0 0.0
    %351 = vmatpush1.msra.mxu0 0.0
    %352 = vmatprep.subr.mxu0 0.0
    %353 = vmatpush1.msra.mxu0 0.0
    %354 = vmatprep.subr.mxu0 0.0
    %355 = vmatpush1.msra.mxu0 0.0
    %356 = vmatprep.subr.mxu0 0.0
    %357 = vmatpush1.msra.mxu0 0.0
    %358 = vmatprep.subr.mxu0 0.0
    %359 = vmatpush1.msra.mxu0 0.0
    %360 = vmatprep.subr.mxu0 0.0
    %361 = vmatpush1.msra.mxu0 0.0
    %362 = vmatprep.subr.mxu0 0.0
    %363 = vmatpush1.msra.mxu0 0.0
    %364 = vmatprep.subr.mxu0 0.0
    %365 = vmatpush1.msra.mxu0 0.0
    %366 = vmatprep.subr.mxu0 0.0
    %367 = vmatpush1.msra.mxu0 0.0
    %368 = vmatprep.subr.mxu0 0.0
    %369 = vmatpush1.msra.mxu0 0.0
    %370 = vmatprep.subr.mxu0 0.0
    %371 = vmatpush1.msra.mxu0 0.0
    %372 = vmatprep.subr.mxu0 0.0
    %373 = vmatpush1.msra.mxu0 0.0
    %374 = vmatprep.subr.mxu0 0.0
    %375 = vmatpush1.msra.mxu0 0.0
    %376 = vmatprep.subr.mxu0 0.0
    %377 = vmatpush1.msra.mxu0 0.0
    %378 = vmatprep.subr.mxu0 0.0
    %379 = vmatpush1.msra.mxu0 0.0
    %380 = vmatprep.subr.mxu0 0.0
    %381 = vmatpush1.msra.mxu0 0.0
    %382 = vmatprep.subr.mxu0 0.0
    %383 = vmatpush1.msra.mxu0 0.0
    %384 = vmatprep.subr.mxu0 0.0
    %385 = vmatpush1.msra.mxu0 0.0
    %386 = vmatprep.subr.mxu0 0.0
    %387 = vmatpush1.msra.mxu0 0.0
    %388 = vmatprep.subr.mxu0 0.0
    %389 = vmatpush1.msra.mxu0 0.0
    %390 = vmatprep.subr.mxu0 0.0
    %391 = vmatpush1.msra.mxu0 0.0
    %392 = vmatprep.subr.mxu0 0.0
    %393 = vmatpush1.msra.mxu0 0.0
    %394 = vmatprep.subr.mxu0 0.0
    %395 = vmatpush1.msra.mxu0 0.0
    %396 = vmatprep.subr.mxu0 0.0
    %397 = vmatpush1.msra.mxu0 0.0
    %398 = vmatprep.mubr.f32.mxu0 0.0
    %399 = vmatmul.mubr.f32.gmra.mrb[0].mxu0 %v332
    %v400 = vpop.f32.mrb[0].mxu0
    %v401 = vadd.f32 %v329, %v400
    %v402 = vpop.f32.mrb[0].mxu0
    %403 = vdwg.mxu0
    %405 = vrot.lane.b32.xlu0 %v149, 96
    %v406 = vpop.permute.xlu0 %405
    %v408 = vadd.f32 %v401, %v406
    %vm409 = vcmask 7168
    %410 = vst.msk [vmem:[%s9] sm:$0xff] %vm409, %v408
    // Predicated region
    $region46: #{tpu_custom_call.1} parent=1 // pred_check
      _
    $region47: #{tpu_custom_call.1} parent=1 // pred_check_branch
      %412 = sbr.rel (0) target = $region49
    $region48: #{tpu_custom_call.1} parent=1 // pred_region
      _
    $region49: #{tpu_custom_call.1} parent=1 // pred_fallthru
      _
    // Predicated region
    $region50: #{tpu_custom_call.1} parent=1 // pred_check
      _
    $region51: #{tpu_custom_call.1} parent=1 // pred_check_branch
      %414 = sbr.rel (0) target = $region53
    $region52: #{tpu_custom_call.1} parent=1 // pred_region
      _
    $region53: #{tpu_custom_call.1} parent=1 // pred_fallthru
      _
    %415 = vsyncpa [#allocation4], 1
    %416 = vsyncpa [#allocation6], 1

</llo_original>
